<compile_context>
chip_gen: v5e
topology: v5e:2x2
jax: 0.10.0
libtpu: 0.0.40
codegen_flags: <defaults>
</compile_context>

<pallas_src>
import functools

import jax
import jax.numpy as jnp
from jax.experimental import pallas as pl
from jax.experimental.pallas import tpu as pltpu


# ----------------------------------------------------------------------------
# Kernel 1: encoder_projection (nn.Linear) for the whole batch in one MXU pass.
# ----------------------------------------------------------------------------
def _projection_kernel(x_ref, wt_ref, b_ref, o_ref):
    # x: (B, P), wt: (P, H), b: (1, H) -> o: (B, H)
    acc = jnp.dot(x_ref[...], wt_ref[...], preferred_element_type=jnp.float32)
    o_ref[...] = (acc + b_ref[...]).astype(o_ref.dtype)


def _project(signal_embeds, proj_weight, proj_bias, out_dtype):
    B, P = signal_embeds.shape
    H = proj_weight.shape[0]
    w_t = jnp.transpose(proj_weight)          # (P, H)
    bias2 = proj_bias.reshape(1, H)
    # Whole arrays fit VMEM for any realistic (P, H); no grid needed.
    return pl.pallas_call(
        _projection_kernel,
        out_shape=jax.ShapeDtypeStruct((B, H), out_dtype),
    )(signal_embeds, w_t, bias2)


# ----------------------------------------------------------------------------
# Kernel 2: embedding gather (HBM row DMAs) + signal-row scatter, per batch b.
# ----------------------------------------------------------------------------
def _fuse_kernel(ids_ref, sig_ref,            # scalar prefetch (SMEM)
                 proj_ref, tab_hbm,           # inputs: (1,H) VMEM, (V,H) HBM
                 out_ref,                     # output block (1, S, H) VMEM
                 sem,                         # DMA semaphores (window,)
                 *, seq_len, vocab, window):
    b = pl.program_id(0)

    def start_row(s):
        rid = jnp.clip(ids_ref[b, s], 0, vocab - 1)     # bounds-safe row id
        pltpu.make_async_copy(
            tab_hbm.at[pl.ds(rid, 1), :],               # (1, H) HBM row
            out_ref.at[0, pl.ds(s, 1), :],              # (1, H) dest row
            sem.at[s % window],
        ).start()

    def wait_row(s):
        pltpu.make_async_copy(
            tab_hbm.at[pl.ds(0, 1), :],                 # same-size descriptor
            out_ref.at[0, pl.ds(s, 1), :],
            sem.at[s % window],
        ).wait()

    # Prime the pipeline: `window` row copies in flight.
    for w in range(window):                             # static, window <= 8
        start_row(w)

    # Sliding window: wait row s, immediately launch row s + window.
    @pl.loop(0, seq_len)
    def _(s):
        wait_row(s)

        @pl.when(s + window < seq_len)
        def _():
            start_row(s + window)

    # Scatter: overwrite row signal_id_index[b] with the projected embedding.
    sig = jnp.clip(sig_ref[b], 0, seq_len - 1)
    out_ref[0, pl.ds(sig, 1), :] = proj_ref[...].astype(out_ref.dtype)


def llava_fuse_embeddings(input_ids, signal_id_index, signal_embeds,
                          proj_weight, proj_bias, embed_table):
    """Returns inputs_embeds (B, S, H): embedding lookup with the projected
    encoder embedding scattered into position signal_id_index[b], matching the
    PyTorch forward up to (but not including) `self.llm(batch)`."""
    B, S = input_ids.shape
    V, H = embed_table.shape
    P = signal_embeds.shape[1]
    assert proj_weight.shape == (H, P)        # nn.Linear weight is (out, in)

    out_dtype = embed_table.dtype             # works for f32 or bf16 tables

    # --- Linear projection, one batched MXU pass (hoisted out of the b-grid).
    proj_all = _project(signal_embeds.astype(jnp.float32),
                        proj_weight.astype(jnp.float32),
                        proj_bias.astype(jnp.float32),
                        out_dtype)            # (B, H)

    window = max(1, min(8, S))                # in-flight row DMAs per step

    grid_spec = pltpu.PrefetchScalarGridSpec(
        num_scalar_prefetch=2,                # input_ids, signal_id_index
        grid=(B,),
        in_specs=[
            pl.BlockSpec((1, H), lambda b, ids, sig: (b, 0)),   # proj row b
            pl.BlockSpec(memory_space=pl.ANY),                  # table in HBM
        ],
        out_specs=pl.BlockSpec((1, S, H), lambda b, ids, sig: (b, 0, 0)),
        scratch_shapes=[pltpu.SemaphoreType.DMA((window,))],
    )

    return pl.pallas_call(
        functools.partial(_fuse_kernel, seq_len=S, vocab=V, window=window),
        out_shape=jax.ShapeDtypeStruct((B, S, H), out_dtype),
        grid_spec=grid_spec,
        compiler_params=pltpu.CompilerParams(
            dimension_semantics=("parallel",)),   # independent per-b work
    )(input_ids.astype(jnp.int32), signal_id_index.astype(jnp.int32),
      proj_all, embed_table)


def _reference(input_ids, signal_id_index, signal_embeds,
               proj_weight, proj_bias, embed_table):
    proj = signal_embeds @ proj_weight.T + proj_bias            # (B, H)
    emb = embed_table[input_ids]                                # (B, S, H)
    B = input_ids.shape[0]
    return emb.at[jnp.arange(B), signal_id_index, :].set(proj)


if __name__ == "__main__":
    # Small, deterministic shapes consistent with the module's forward.
    B, S = 2, 8            # batch, sequence length
    P = 16                 # projection_dim (encoder embedding size)
    H = 32                 # llm.config.hidden_size
    V = 64                 # vocab size for the LLM embedding table

    key = jax.random.PRNGKey(0)
    k_ids, k_sig, k_enc, k_w, k_b, k_tab = jax.random.split(key, 6)

    input_ids = jax.random.randint(k_ids, (B, S), 0, V, dtype=jnp.int32)
    signal_id_index = jax.random.randint(k_sig, (B,), 0, S, dtype=jnp.int32)
    # batch['encoder_out'] -> encoder.get_embeddings(...) stands in here as a
    # dense (B, P) signal embedding (the encoder backbone is external).
    signal_embeds = jax.random.normal(k_enc, (B, P), dtype=jnp.float32)

    # Deterministic parameter init (nn.Linear(P, H) and the LLM embed table).
    proj_weight = jax.random.normal(k_w, (H, P), dtype=jnp.float32) * 0.05
    proj_bias = jax.random.normal(k_b, (H,), dtype=jnp.float32) * 0.01
    embed_table = jax.random.normal(k_tab, (V, H), dtype=jnp.float32) * 0.02

    out = llava_fuse_embeddings(input_ids, signal_id_index, signal_embeds,
                                proj_weight, proj_bias, embed_table)
    out = jax.block_until_ready(out)

    ref = _reference(input_ids, signal_id_index, signal_embeds,
                     proj_weight, proj_bias, embed_table)
    assert out.shape == (B, S, H)
    assert jnp.allclose(out, ref, atol=1e-5, rtol=1e-5)

    # TODO(synk): the final `out = self.llm(batch)` (full transformer forward)
    # and the external encoder backbone are separate modules, not implemented.
    print("KERNEL_OK")
</pallas_src>

<mosaic_0001>
module attributes {stable_mosaic.version = 11 : i64} {
  func.func @_projection_kernel(%arg0: memref<2x16xf32, #tpu.memory_space<vmem>>, %arg1: memref<16x32xf32, #tpu.memory_space<vmem>>, %arg2: memref<1x32xf32, #tpu.memory_space<vmem>>, %arg3: memref<2x32xf32, #tpu.memory_space<vmem>>) attributes {dimension_semantics = [], scalar_prefetch = 0 : i64, scratch_operands = 0 : i64, tpu.core_type = #tpu.core_type<tc>} {
    %c0 = arith.constant 0 : index
    %c0_0 = arith.constant 0 : index
    %0 = vector.load %arg0[%c0, %c0_0] : memref<2x16xf32, #tpu.memory_space<vmem>>, vector<2x16xf32>
    %c0_1 = arith.constant 0 : index
    %c0_2 = arith.constant 0 : index
    %1 = vector.load %arg1[%c0_1, %c0_2] : memref<16x32xf32, #tpu.memory_space<vmem>>, vector<16x32xf32>
    %cst = arith.constant dense<0.000000e+00> : vector<2x32xf32>
    %2 = tpu.matmul %0, %1, %cst {dimension_numbers = #tpu.dot_dimension_numbers<[1], [0], [0], [1], [0, 0, 1, 1], [], []>} : vector<2x16xf32>, vector<16x32xf32>, vector<2x32xf32> -> vector<2x32xf32>
    %c0_3 = arith.constant 0 : index
    %c0_4 = arith.constant 0 : index
    %3 = vector.load %arg2[%c0_3, %c0_4] : memref<1x32xf32, #tpu.memory_space<vmem>>, vector<1x32xf32>
    %4 = vector.broadcast %3 : vector<1x32xf32> to vector<2x32xf32>
    %5 = arith.addf %2, %4 : vector<2x32xf32>
    %c0_5 = arith.constant 0 : index
    %c0_6 = arith.constant 0 : index
    %6 = vector.load %arg3[%c0_5, %c0_6] : memref<2x32xf32, #tpu.memory_space<vmem>>, vector<2x32xf32>
    tpu.vector_store %arg3[%c0_5, %c0_6], %5 {strides = array<i32>} : memref<2x32xf32, #tpu.memory_space<vmem>>, vector<2x32xf32>,
    return
  }
}

</mosaic_0001>

<llo_original>
// kernel: tpu_custom_call.1
$region0: #{tpu_custom_call.1}
  #allocation0 [shape = 'u32[]', space=smem, size = 0x4, offset = 0x4, fixed_abs, tag = 'smem constant byte address 0x4 - core index']
  #allocation1 [shape = 'u32[72,128]{1,0:T(1,128)}', space=vmem, size = 0x9000, scoped, tag = 'internal scratch']
  %s0 = inlined_call_operand.hbm [shape: f32[2,16], index: 0, kind: input, shape index: {}]
  %s1 = inlined_call_operand.hbm [shape: f32[16,32], index: 1, kind: input, shape index: {}]
  %s2 = inlined_call_operand.vmem [shape: f32[1,32], index: 2, kind: input, shape index: {}]
  %s3 = inlined_call_operand.hbm [shape: f32[2,32], index: 3, kind: output, shape index: {}]
  %s4 = sld [smem:[#allocation0]]
  $region30: #{tpu_custom_call.1} parent=0
    _
  %s6 = ssub.s32 1, %s4
  %s7 = scalar_select 0, %s6, %s4
  $region1: #{tpu_custom_call.1} parent=0
    #allocation2 [shape = 'u8[1024]{0}', space=vmem, size = 0x400, scoped, tag = 'input window, operand 0, single buffered']
    #allocation3 [shape = 's32[1]{0}', space=sflag, size = 0x4, scoped, tag = 'scoped memory for tpu_custom_call.1']
    #allocation4 [shape = 's32[1]{0}', space=sflag, size = 0x4, scoped, tag = 'scoped memory for tpu_custom_call.1']
    #allocation5 [shape = 'u8[8192]{0}', space=vmem, size = 0x2000, scoped, tag = 'input window, operand 1, single buffered']
    #allocation6 [shape = 's32[1]{0}', space=sflag, size = 0x4, scoped, tag = 'scoped memory for tpu_custom_call.1']
    #allocation7 [shape = 'u8[1024]{0}', space=vmem, size = 0x400, scoped, tag = 'output window, operand 0, single buffered']
    %8 = vsyncpa [#allocation3], 0
    %9 = vsyncpa [#allocation6], 0
    %10 = vsyncpa [#allocation4], 0
    // Predicated region
    $region2: #{tpu_custom_call.1} parent=1 // pred_check
      _
    $region3: #{tpu_custom_call.1} parent=1 // pred_check_branch
      %12 = sbr.rel (0) target = $region5
    $region4: #{tpu_custom_call.1} parent=1 // pred_region
      %14 = vsyncadd [#allocation3], 0
      %s16 = sshll.u32 %s0, 4
      %s17 = int_to_ptr.hbm [resolvable:$true] %s16
      %s18 = sshll.u32 [#allocation2], 4
      %s19 = int_to_ptr.vmem [resolvable:$true] %s18
      %21 = dma.hbm_to_vmem [thread:$0]  %s17, 32, %s19, [#allocation3]
    $region5: #{tpu_custom_call.1} parent=1 // pred_fallthru
      _
    // Predicated region
    $region6: #{tpu_custom_call.1} parent=1 // pred_check
      _
    $region7: #{tpu_custom_call.1} parent=1 // pred_check_branch
      %23 = sbr.rel (0) target = $region9
    $region8: #{tpu_custom_call.1} parent=1 // pred_region
      %25 = vsyncadd [#allocation6], 0
      %s26 = sshll.u32 %s1, 4
      %s27 = int_to_ptr.hbm [resolvable:$true] %s26
      %s28 = sshll.u32 [#allocation5], 4
      %s29 = int_to_ptr.vmem [resolvable:$true] %s28
      %34 = dma.hbm_to_vmem [thread:$0]  %s27, 256, %s29, [#allocation6], 128, 128, 8
    $region9: #{tpu_custom_call.1} parent=1 // pred_fallthru
      _
    // Predicated region
    $region10: #{tpu_custom_call.1} parent=1 // pred_check
      _
    $region11: #{tpu_custom_call.1} parent=1 // pred_check_branch
      %36 = sbr.rel (0) target = $region13
    $region12: #{tpu_custom_call.1} parent=1 // pred_region
      _
    $region13: #{tpu_custom_call.1} parent=1 // pred_fallthru
      _
    // Predicated region
    $region14: #{tpu_custom_call.1} parent=1 // pred_check
      _
    $region15: #{tpu_custom_call.1} parent=1 // pred_check_branch
      %38 = sbr.rel (0) target = $region17
    $region16: #{tpu_custom_call.1} parent=1 // pred_region
      %40 = dma.done [#allocation3], 32
    $region17: #{tpu_custom_call.1} parent=1 // pred_fallthru
      _
    // Predicated region
    $region18: #{tpu_custom_call.1} parent=1 // pred_check
      _
    $region19: #{tpu_custom_call.1} parent=1 // pred_check_branch
      %42 = sbr.rel (0) target = $region21
    $region20: #{tpu_custom_call.1} parent=1 // pred_region
      %44 = dma.done [#allocation6], 256
    $region21: #{tpu_custom_call.1} parent=1 // pred_fallthru
      _
    %v45 = vld [vmem:[#allocation2] sm:$0x3]
    %v46 = vld [vmem:[#allocation5] sm:$0xff]
    %v47 = vld [vmem:[#allocation5 + $0x8] sm:$0xff]
    %v48 = vld [vmem:[%s2] sm:$0x1]
    %v50 = vperm.slane %v48, 0
    %vm52 = vcmask 130048
    %v54 = vsel %vm52, %v45, 0
    %56 = vmatpush.msra.mxu0 0.0
    %57 = vmatpush.msra.mxu0 0.0
    %58 = vmatpush.msra.mxu0 0.0
    %59 = vmatpush.msra.mxu0 0.0
    %60 = vmatpush.msra.mxu0 0.0
    %61 = vmatpush.msra.mxu0 0.0
    %62 = vmatpush.msra.mxu0 0.0
    %63 = vmatpush.msra.mxu0 0.0
    %64 = vmatpush.msra.mxu0 0.0
    %65 = vmatpush.msra.mxu0 0.0
    %66 = vmatpush.msra.mxu0 0.0
    %67 = vmatpush.msra.mxu0 0.0
    %68 = vmatpush.msra.mxu0 0.0
    %69 = vmatpush.msra.mxu0 0.0
    %70 = vmatpush.msra.mxu0 %v47
    %71 = vmatpush.msra.mxu0 %v46
    %72 = vmatmul.f32.gmra.mxu0 %v54
    %v73 = vpop.f32.mrf.mxu0
    %v74 = vadd.f32 %v50, %v73
    %75 = vdwg.mxu0
    %vm76 = vcmask 254976
    %77 = vst.msk [vmem:[#allocation7] sm:$0x3] %vm76, %v74
    // Predicated region
    $region22: #{tpu_custom_call.1} parent=1 // pred_check
      _
    $region23: #{tpu_custom_call.1} parent=1 // pred_check_branch
      %79 = sbr.rel (0) target = $region25
    $region24: #{tpu_custom_call.1} parent=1 // pred_region
      %81 = vsyncadd [#allocation4], 0
      %s83 = sshll.u32 [#allocation7], 4
      %s84 = int_to_ptr.vmem [resolvable:$true] %s83
      %s85 = sshll.u32 %s3, 4
      %s86 = int_to_ptr.hbm [resolvable:$true] %s85
      %88 = dma.vmem_to_hbm [thread:$0]  %s84, 32, %s86, [#allocation4]
    $region25: #{tpu_custom_call.1} parent=1 // pred_fallthru
      _
    // Predicated region
    $region26: #{tpu_custom_call.1} parent=1 // pred_check
      _
    $region27: #{tpu_custom_call.1} parent=1 // pred_check_branch
      %90 = sbr.rel (0) target = $region29
    $region28: #{tpu_custom_call.1} parent=1 // pred_region
      %92 = dma.done [#allocation4], 32
    $region29: #{tpu_custom_call.1} parent=1 // pred_fallthru
      _
    %93 = vsyncpa [#allocation3], 1
    %94 = vsyncpa [#allocation6], 1
    %95 = vsyncpa [#allocation4], 1

</llo_original>
